<compile_context>
chip_gen: v7x
topology: tpu7x:2x2x1
jax: 0.10.0
libtpu: 0.0.40
codegen_flags: <defaults>
</compile_context>

<pallas_src>
import functools

import jax
import jax.numpy as jnp
from jax.experimental import pallas as pl
from jax.experimental.pallas import tpu as pltpu


def _round_up(x, m):
    return ((x + m - 1) // m) * m


# ---------------------------------------------------------------------------
# Kernel: one pallas_call, in-kernel unrolled layer loop
# ---------------------------------------------------------------------------
def _encoder_kernel(tok_ref, emb_ref, w_ref, b_ref, h0_ref, out_ref, *,
                    hidden_pad, n_layers):
    """Fused embedding-row + n_layers applications of the (shared) GRU cell.

    tok_ref: (1,)          int32  token id (SMEM, scalar-prefetched; also
                                  drives the embedding index_map)
    emb_ref: (1, 1, Hp)    param  the single gathered embedding row
    w_ref:   (2Hp, 4Hp)    param  fused GRU weight [r_pre | z_pre | gi_n | gh_n]
    b_ref:   (1, 4Hp)      f32    fused bias [b_r(ih+hh) | b_z(ih+hh) | b_ih_n | b_hh_n]
    h0_ref:  (1, Hp)       f32    initial hidden state (padded lanes MUST be 0)
    out_ref: (1, Hp)       f32    final hidden state
    """
    Hp = hidden_pad
    w = w_ref[...]                        # weights stay resident in vregs/VMEM
    b = b_ref[...]
    x0 = emb_ref[0].astype(jnp.float32)   # (1, Hp) embedded token
    h0 = h0_ref[...]                      # (1, Hp)

    def layer(_, carry):
        x, h = carry
        # LHS = [x | h] : (1, 2Hp); one K=2Hp matmul replaces the gi/gh pair.
        xh = jnp.concatenate([x, h], axis=1).astype(w.dtype)
        g = jnp.dot(xh, w, preferred_element_type=jnp.float32) + b
        # Gate blocks are 128-lane aligned -> pure per-lane VPU/EUP math.
        r = jax.nn.sigmoid(g[:, 0:Hp])
        z = jax.nn.sigmoid(g[:, Hp:2 * Hp])
        n = jnp.tanh(g[:, 2 * Hp:3 * Hp] + r * g[:, 3 * Hp:4 * Hp])
        h_new = (1.0 - z) * n + z * h
        # seq_len=1, 1-layer GRU: step output == new hidden == next input.
        return h_new, h_new

    _, h_fin = jax.lax.fori_loop(0, n_layers, layer, (x0, h0), unroll=True)
    out_ref[...] = h_fin.astype(out_ref.dtype)


# ---------------------------------------------------------------------------
# Functional forward (jit-compiled; params passed as arguments)
# ---------------------------------------------------------------------------
def encoder_forward(params, token, hidden, *, hidden_size, hidden_pad,
                    n_layers, vmem_limit_bytes):
    """token: int32 scalar; hidden: (1, 1, H). Returns (output, hidden)."""
    H, Hp = hidden_size, hidden_pad
    tok = jnp.asarray(token, jnp.int32).reshape(1)
    # Contract: padded lanes of h0 must be zero (keeps padded state exactly 0).
    h0 = jnp.pad(hidden.reshape(1, H).astype(jnp.float32),
                 ((0, 0), (0, Hp - H)))

    kernel = functools.partial(_encoder_kernel, hidden_pad=Hp,
                               n_layers=n_layers)

    h_pad = pl.pallas_call(
        kernel,
        out_shape=jax.ShapeDtypeStruct((1, Hp), jnp.float32),
        grid_spec=pltpu.PrefetchScalarGridSpec(
            num_scalar_prefetch=1,
            grid=(1,),
            in_specs=[
                # Embedding: gather ONE row, index driven by the prefetched token.
                pl.BlockSpec((1, 1, Hp), lambda i, tok: (tok[0], 0, 0)),
                pl.BlockSpec((2 * Hp, 4 * Hp), lambda i, tok: (0, 0)),  # fused W
                pl.BlockSpec((1, 4 * Hp), lambda i, tok: (0, 0)),       # fused bias
                pl.BlockSpec((1, Hp), lambda i, tok: (0, 0)),           # h0
            ],
            out_specs=pl.BlockSpec((1, Hp), lambda i, tok: (0, 0)),
        ),
        compiler_params=pltpu.CompilerParams(
            dimension_semantics=("arbitrary",),
            vmem_limit_bytes=vmem_limit_bytes),
    )(tok, params["emb"], params["w"], params["b"], h0)

    h_out = h_pad[:, :H].reshape(1, 1, H)
    # nn.GRU(num_layers=1, seq_len=1): output == new hidden state.
    return h_out, h_out


# ---------------------------------------------------------------------------
# Parameter layout helpers (PyTorch layout -> fused lane-aligned layout)
# ---------------------------------------------------------------------------
def _fuse_gru_params(w_ih, w_hh, b_ih, b_hh, H, Hp, param_dtype):
    """PyTorch GRU (3H,H)/(3H,) weights -> fused (2Hp,4Hp) weight + (1,4Hp) bias.

    Column blocks: [r_pre | z_pre | gi_n | gh_n], each 128-lane aligned.
    Row blocks:    rows 0:Hp consume x, rows Hp:2Hp consume h.
    """
    def gate(w, g):
        return w[g * H:(g + 1) * H, :].T                  # (H,H): x @ gate == x @ W_g^T

    W = jnp.zeros((2 * Hp, 4 * Hp), jnp.float32)
    # r: x part + h part
    W = W.at[:H, 0:H].set(gate(w_ih, 0))
    W = W.at[Hp:Hp + H, 0:H].set(gate(w_hh, 0))
    # z: x part + h part
    W = W.at[:H, Hp:Hp + H].set(gate(w_ih, 1))
    W = W.at[Hp:Hp + H, Hp:Hp + H].set(gate(w_hh, 1))
    # gi_n: x part only
    W = W.at[:H, 2 * Hp:2 * Hp + H].set(gate(w_ih, 2))
    # gh_n: h part only
    W = W.at[Hp:Hp + H, 3 * Hp:3 * Hp + H].set(gate(w_hh, 2))

    b = jnp.zeros((1, 4 * Hp), jnp.float32)
    b = b.at[0, 0:H].set(b_ih[0:H] + b_hh[0:H])                 # r (pre-summed)
    b = b.at[0, Hp:Hp + H].set(b_ih[H:2 * H] + b_hh[H:2 * H])   # z (pre-summed)
    b = b.at[0, 2 * Hp:2 * Hp + H].set(b_ih[2 * H:3 * H])       # gi_n
    b = b.at[0, 3 * Hp:3 * Hp + H].set(b_hh[2 * H:3 * H])       # gh_n
    return W.astype(param_dtype), b                              # bias stays f32


# ---------------------------------------------------------------------------
# Module wrapper
# ---------------------------------------------------------------------------
class EncoderRNNPallas:
    """JAX/Pallas port of Old_Model/Seq2Seq.py::EncoderRNN (forward only).

    NOTE: exactly like the original PyTorch module, the SAME GRU cell (one set
    of weights) is applied n_layers times inside forward(); this is NOT a
    stacked multi-layer GRU."""

    def __init__(self, input_size, hidden_size, n_layers=1, key=None,
                 param_dtype=jnp.float32):
        assert n_layers >= 1
        self.n_layers = n_layers
        self.hidden_size = hidden_size
        if key is None:
            key = jax.random.PRNGKey(0)
        k_emb, k_wih, k_whh, k_bih, k_bhh = jax.random.split(key, 5)

        H = hidden_size
        Hp = _round_up(H, 128)
        self.hidden_pad = Hp
        bound = 1.0 / float(H) ** 0.5

        # Raw parameters (PyTorch layout), kept for reference checking.
        self.embedding = jax.random.normal(k_emb, (input_size, H), jnp.float32)
        self.w_ih = jax.random.uniform(k_wih, (3 * H, H), jnp.float32, -bound, bound)
        self.w_hh = jax.random.uniform(k_whh, (3 * H, H), jnp.float32, -bound, bound)
        self.b_ih = jax.random.uniform(k_bih, (3 * H,), jnp.float32, -bound, bound)
        self.b_hh = jax.random.uniform(k_bhh, (3 * H,), jnp.float32, -bound, bound)

        # Kernel-layout parameters.  Embedding is (V, 1, Hp) so the per-token
        # row is a full-extent (1, Hp) block selected by the token index_map.
        w_fused, b_fused = _fuse_gru_params(self.w_ih, self.w_hh,
                                            self.b_ih, self.b_hh,
                                            H, Hp, param_dtype)
        emb_pad = jnp.zeros((input_size, 1, Hp), param_dtype)
        emb_pad = emb_pad.at[:, 0, :H].set(self.embedding.astype(param_dtype))
        self._params = {"emb": emb_pad, "w": w_fused, "b": b_fused}

        # VMEM budget with headroom (double-buffered blocks + internal scratch).
        itemsize = jnp.dtype(param_dtype).itemsize
        block_bytes = (Hp * itemsize                 # embedding row
                       + 2 * Hp * 4 * Hp * itemsize  # fused weight
                       + 4 * Hp * 4                  # fused bias
                       + Hp * 4                      # h0
                       + Hp * 4)                     # out
        vmem_limit = int(min(64 << 20, max(16 << 20, 2 * block_bytes + (2 << 20))))

        self._forward = jax.jit(functools.partial(
            encoder_forward, hidden_size=H, hidden_pad=Hp,
            n_layers=n_layers, vmem_limit_bytes=vmem_limit))

    def init_hidden(self):
        return jnp.zeros((1, 1, self.hidden_size), jnp.float32)

    def forward(self, token, hidden):
        return self._forward(self._params, token, hidden)


# ---------------------------------------------------------------------------
# Pure-JAX reference (PyTorch semantics, raw f32 weights)
# ---------------------------------------------------------------------------
def _encoder_ref(emb, w_ih, w_hh, b_ih, b_hh, token, hidden, n_layers):
    H = emb.shape[1]
    x = emb[token].reshape(1, H)
    h = hidden.reshape(1, H)
    for _ in range(n_layers):
        gi = x @ w_ih.T + b_ih
        gh = h @ w_hh.T + b_hh
        r = jax.nn.sigmoid(gi[:, :H] + gh[:, :H])
        z = jax.nn.sigmoid(gi[:, H:2 * H] + gh[:, H:2 * H])
        n = jnp.tanh(gi[:, 2 * H:] + r * gh[:, 2 * H:])
        h = (1.0 - z) * n + z * h
        x = h
    return h


if __name__ == "__main__":
    input_size = 16    # vocab size
    hidden_size = 32
    n_layers = 2       # exercises the in-kernel unrolled recurrence

    enc = EncoderRNNPallas(input_size, hidden_size, n_layers,
                           key=jax.random.PRNGKey(0))

    token = jnp.array(3, dtype=jnp.int32)   # single token index
    hidden0 = enc.init_hidden()             # (1, 1, H) zeros

    output, hidden = enc.forward(token, hidden0)
    output = jax.block_until_ready(output)
    hidden = jax.block_until_ready(hidden)

    h_ref = _encoder_ref(enc.embedding, enc.w_ih, enc.w_hh, enc.b_ih, enc.b_hh,
                         token, hidden0, n_layers)

    assert output.shape == (1, 1, hidden_size)
    assert hidden.shape == (1, 1, hidden_size)
    assert jnp.allclose(output.reshape(1, hidden_size), h_ref, atol=1e-5, rtol=1e-5)
    assert jnp.allclose(hidden.reshape(1, hidden_size), h_ref, atol=1e-5, rtol=1e-5)

    print("KERNEL_OK")
</pallas_src>

<mosaic_0001>
module attributes {stable_mosaic.version = 11 : i64} {
  func.func @_encoder_kernel(%arg0: i32, %arg1: memref<1xi32, #tpu.memory_space<smem>>, %arg2: memref<1x1x128xf32, #tpu.memory_space<vmem>>, %arg3: memref<256x512xf32, #tpu.memory_space<vmem>>, %arg4: memref<1x512xf32, #tpu.memory_space<vmem>>, %arg5: memref<1x128xf32, #tpu.memory_space<vmem>>, %arg6: memref<1x128xf32, #tpu.memory_space<vmem>>) attributes {dimension_semantics = [#tpu.dimension_semantics<arbitrary>], iteration_bounds = array<i64: 1>, scalar_prefetch = 1 : i64, scratch_operands = 0 : i64, tpu.core_type = #tpu.core_type<tc>, window_params = [{transform_indices = @transform_0, window_bounds = array<i64: 1, 1, 128>}, {pipeline_mode = #tpu.pipeline_mode<synchronous>, transform_indices = @transform_1, window_bounds = array<i64: 256, 512>}, {pipeline_mode = #tpu.pipeline_mode<synchronous>, transform_indices = @transform_2, window_bounds = array<i64: 1, 512>}, {pipeline_mode = #tpu.pipeline_mode<synchronous>, transform_indices = @transform_3, window_bounds = array<i64: 1, 128>}, {pipeline_mode = #tpu.pipeline_mode<synchronous>, transform_indices = @transform_4, window_bounds = array<i64: 1, 128>}]} {
    %c0 = arith.constant 0 : index
    %c0_0 = arith.constant 0 : index
    %0 = vector.load %arg3[%c0, %c0_0] : memref<256x512xf32, #tpu.memory_space<vmem>>, vector<256x512xf32>
    %c0_1 = arith.constant 0 : index
    %c0_2 = arith.constant 0 : index
    %1 = vector.load %arg4[%c0_1, %c0_2] : memref<1x512xf32, #tpu.memory_space<vmem>>, vector<1x512xf32>
    %c0_3 = arith.constant 0 : index
    %c0_4 = arith.constant 0 : index
    %c0_5 = arith.constant 0 : index
    %2 = vector.load %arg2[%c0_3, %c0_4, %c0_5] : memref<1x1x128xf32, #tpu.memory_space<vmem>>, vector<1x1x128xf32>
    %3 = vector.shape_cast %2 : vector<1x1x128xf32> to vector<1x128xf32>
    %c0_6 = arith.constant 0 : index
    %c0_7 = arith.constant 0 : index
    %4 = vector.load %arg5[%c0_6, %c0_7] : memref<1x128xf32, #tpu.memory_space<vmem>>, vector<1x128xf32>
    %c0_i32 = arith.constant 0 : i32
    %5 = tpu.concatenate %3, %4 in 1 : vector<1x128xf32>, vector<1x128xf32> -> vector<1x256xf32>
    %cst = arith.constant dense<0.000000e+00> : vector<1x512xf32>
    %6 = tpu.matmul %5, %0, %cst {dimension_numbers = #tpu.dot_dimension_numbers<[1], [0], [0], [1], [0, 0, 1, 1], [], []>} : vector<1x256xf32>, vector<256x512xf32>, vector<1x512xf32> -> vector<1x512xf32>
    %7 = arith.addf %6, %1 : vector<1x512xf32>
    %8 = vector.extract_strided_slice %7 {offsets = [0, 0], sizes = [1, 128], strides = [1, 1]} : vector<1x512xf32> to vector<1x128xf32>
    %9 = arith.negf %8 : vector<1x128xf32>
    %10 = math.exp %9 : vector<1x128xf32>
    %cst_8 = arith.constant 1.000000e+00 : f32
    %11 = vector.broadcast %cst_8 : f32 to vector<1x128xf32>
    %12 = arith.addf %11, %10 : vector<1x128xf32>
    %13 = arith.divf %11, %12 : vector<1x128xf32>
    %14 = vector.extract_strided_slice %7 {offsets = [0, 128], sizes = [1, 128], strides = [1, 1]} : vector<1x512xf32> to vector<1x128xf32>
    %15 = arith.negf %14 : vector<1x128xf32>
    %16 = math.exp %15 : vector<1x128xf32>
    %cst_9 = arith.constant 1.000000e+00 : f32
    %17 = vector.broadcast %cst_9 : f32 to vector<1x128xf32>
    %18 = arith.addf %17, %16 : vector<1x128xf32>
    %19 = arith.divf %17, %18 : vector<1x128xf32>
    %20 = vector.extract_strided_slice %7 {offsets = [0, 256], sizes = [1, 128], strides = [1, 1]} : vector<1x512xf32> to vector<1x128xf32>
    %21 = vector.extract_strided_slice %7 {offsets = [0, 384], sizes = [1, 128], strides = [1, 1]} : vector<1x512xf32> to vector<1x128xf32>
    %22 = arith.mulf %13, %21 : vector<1x128xf32>
    %23 = arith.addf %20, %22 : vector<1x128xf32>
    %24 = math.tanh %23 : vector<1x128xf32>
    %cst_10 = arith.constant 1.000000e+00 : f32
    %25 = vector.broadcast %cst_10 : f32 to vector<1x128xf32>
    %26 = arith.subf %25, %19 : vector<1x128xf32>
    %27 = arith.mulf %26, %24 : vector<1x128xf32>
    %28 = arith.mulf %19, %4 : vector<1x128xf32>
    %29 = arith.addf %27, %28 : vector<1x128xf32>
    %c1_i32 = arith.constant 1 : i32
    %30 = tpu.concatenate %29, %29 in 1 : vector<1x128xf32>, vector<1x128xf32> -> vector<1x256xf32>
    %cst_11 = arith.constant dense<0.000000e+00> : vector<1x512xf32>
    %31 = tpu.matmul %30, %0, %cst_11 {dimension_numbers = #tpu.dot_dimension_numbers<[1], [0], [0], [1], [0, 0, 1, 1], [], []>} : vector<1x256xf32>, vector<256x512xf32>, vector<1x512xf32> -> vector<1x512xf32>
    %32 = arith.addf %31, %1 : vector<1x512xf32>
    %33 = vector.extract_strided_slice %32 {offsets = [0, 0], sizes = [1, 128], strides = [1, 1]} : vector<1x512xf32> to vector<1x128xf32>
    %34 = arith.negf %33 : vector<1x128xf32>
    %35 = math.exp %34 : vector<1x128xf32>
    %cst_12 = arith.constant 1.000000e+00 : f32
    %36 = vector.broadcast %cst_12 : f32 to vector<1x128xf32>
    %37 = arith.addf %36, %35 : vector<1x128xf32>
    %38 = arith.divf %36, %37 : vector<1x128xf32>
    %39 = vector.extract_strided_slice %32 {offsets = [0, 128], sizes = [1, 128], strides = [1, 1]} : vector<1x512xf32> to vector<1x128xf32>
    %40 = arith.negf %39 : vector<1x128xf32>
    %41 = math.exp %40 : vector<1x128xf32>
    %cst_13 = arith.constant 1.000000e+00 : f32
    %42 = vector.broadcast %cst_13 : f32 to vector<1x128xf32>
    %43 = arith.addf %42, %41 : vector<1x128xf32>
    %44 = arith.divf %42, %43 : vector<1x128xf32>
    %45 = vector.extract_strided_slice %32 {offsets = [0, 256], sizes = [1, 128], strides = [1, 1]} : vector<1x512xf32> to vector<1x128xf32>
    %46 = vector.extract_strided_slice %32 {offsets = [0, 384], sizes = [1, 128], strides = [1, 1]} : vector<1x512xf32> to vector<1x128xf32>
    %47 = arith.mulf %38, %46 : vector<1x128xf32>
    %48 = arith.addf %45, %47 : vector<1x128xf32>
    %49 = math.tanh %48 : vector<1x128xf32>
    %cst_14 = arith.constant 1.000000e+00 : f32
    %50 = vector.broadcast %cst_14 : f32 to vector<1x128xf32>
    %51 = arith.subf %50, %44 : vector<1x128xf32>
    %52 = arith.mulf %51, %49 : vector<1x128xf32>
    %53 = arith.mulf %44, %29 : vector<1x128xf32>
    %54 = arith.addf %52, %53 : vector<1x128xf32>
    %c0_15 = arith.constant 0 : index
    %c0_16 = arith.constant 0 : index
    %55 = vector.load %arg6[%c0_15, %c0_16] : memref<1x128xf32, #tpu.memory_space<vmem>>, vector<1x128xf32>
    tpu.vector_store %arg6[%c0_15, %c0_16], %54 {strides = array<i32>} : memref<1x128xf32, #tpu.memory_space<vmem>>, vector<1x128xf32>,
    return
  }
  func.func @transform_0(%arg0: i32, %arg1: memref<1xi32, #tpu.memory_space<smem>>) -> (i32, i32, i32) {
    %c0 = arith.constant 0 : index
    %0 = memref.load %arg1[%c0] : memref<1xi32, #tpu.memory_space<smem>>
    %c0_i32 = arith.constant 0 : i32
    %c0_i32_0 = arith.constant 0 : i32
    %c0_i32_1 = arith.constant 0 : i32
    return %0, %c0_i32, %c0_i32_0 : i32, i32, i32
  }
  func.func @transform_1(%arg0: i32, %arg1: memref<1xi32, #tpu.memory_space<smem>>) -> (i32, i32) {
    %c0_i32 = arith.constant 0 : i32
    %c0_i32_0 = arith.constant 0 : i32
    %c0_i32_1 = arith.constant 0 : i32
    return %c0_i32, %c0_i32_0 : i32, i32
  }
  func.func @transform_2(%arg0: i32, %arg1: memref<1xi32, #tpu.memory_space<smem>>) -> (i32, i32) {
    %c0_i32 = arith.constant 0 : i32
    %c0_i32_0 = arith.constant 0 : i32
    %c0_i32_1 = arith.constant 0 : i32
    return %c0_i32, %c0_i32_0 : i32, i32
  }
  func.func @transform_3(%arg0: i32, %arg1: memref<1xi32, #tpu.memory_space<smem>>) -> (i32, i32) {
    %c0_i32 = arith.constant 0 : i32
    %c0_i32_0 = arith.constant 0 : i32
    %c0_i32_1 = arith.constant 0 : i32
    return %c0_i32, %c0_i32_0 : i32, i32
  }
  func.func @transform_4(%arg0: i32, %arg1: memref<1xi32, #tpu.memory_space<smem>>) -> (i32, i32) {
    %c0_i32 = arith.constant 0 : i32
    %c0_i32_0 = arith.constant 0 : i32
    %c0_i32_1 = arith.constant 0 : i32
    return %c0_i32, %c0_i32_0 : i32, i32
  }
}

</mosaic_0001>

<llo_original>
// kernel: encoder_forward.1
$region0: #{encoder_forward.1}
  #allocation0 [shape = 'u32[]', space=smem, size = 0x4, offset = 0x4, fixed_abs, tag = 'smem constant byte address 0x4 - core index']
  #allocation1 [shape = 'u32[144,128]{1,0:T(1,128)}', space=vmem, size = 0x12000, scoped, tag = 'internal scratch']
  #allocation2 [shape = 's32[1]{0}', space=sflag, size = 0x4, scoped, tag = 'scoped memory for encoder_forward.1']
  #allocation3 [shape = 's32[1]{0:T(128)S(6)}', space=smem, size = 0x200, scoped, tag = 'prefetched SMEM operand 0']
  %s0 = inlined_call_operand.<no memory space> [shape: s32[1], index: 0, kind: input, shape index: {}]
  %s1 = inlined_call_operand.vmem [shape: f32[16,1,128], index: 1, kind: input, shape index: {}]
  %s2 = inlined_call_operand.hbm [shape: f32[256,512], index: 2, kind: input, shape index: {}]
  %s3 = inlined_call_operand.hbm [shape: f32[1,512], index: 3, kind: input, shape index: {}]
  %s4 = inlined_call_operand.vmem [shape: f32[1,128], index: 4, kind: input, shape index: {}]
  %s5 = inlined_call_operand.vmem [shape: f32[1,128], index: 5, kind: output, shape index: {}]
  %s6 = sld [smem:[#allocation0]]
  $region34: #{encoder_forward.1} parent=0
    _
  %s8 = ssub.s32 1, %s6
  %s9 = scalar_select 0, %s8, %s6
  %10 = sst [smem:[#allocation3]] %s0
  $region1: #{encoder_forward.1} parent=0
    #allocation4 [shape = 'u8[524288]{0}', space=vmem, size = 0x80000, scoped, tag = 'input window, operand 2, single buffered']
    #allocation5 [shape = 's32[1]{0}', space=sflag, size = 0x4, scoped, tag = 'scoped memory for encoder_forward.1']
    #allocation6 [shape = 'u8[2048]{0}', space=vmem, size = 0x800, scoped, tag = 'input window, operand 3, single buffered']
    #allocation7 [shape = 's32[1]{0}', space=sflag, size = 0x4, scoped, tag = 'scoped memory for encoder_forward.1']
    %11 = vsyncpa [#allocation5], 0
    %12 = vsyncpa [#allocation7], 0
    // Predicated region
    $region2: #{encoder_forward.1} parent=1 // pred_check
      _
    $region3: #{encoder_forward.1} parent=1 // pred_check_branch
      %14 = sbr.rel (0) target = $region5
    $region4: #{encoder_forward.1} parent=1 // pred_region
      %s15 = sld [smem:[#allocation3]]
      %p16 = scmp.lt.s32.totalorder %s15, 15
      %s17 = scalar_select %p16, %s15, 15
      %s18 = scalar_lea.vmem %s1, %s17
      %s19 = sld [smem:[#allocation3]]
    $region5: #{encoder_forward.1} parent=1 // pred_fallthru
      _
    // Predicated region
    $region6: #{encoder_forward.1} parent=1 // pred_check
      _
    $region7: #{encoder_forward.1} parent=1 // pred_check_branch
      %21 = sbr.rel (0) target = $region9
    $region8: #{encoder_forward.1} parent=1 // pred_region
      %s23 = ssub.s32 16384, 16384
      %24 = vsyncadd [#allocation5], %s23
      %s25 = sshll.u32 [#allocation4], 4
      %s26 = int_to_ptr.vmem [resolvable:$true] %s25
      %31 = dma.hbm_to_vmem [thread:$0]  %s2, 16384, %s26, [#allocation5], 512, 512, 32
    $region9: #{encoder_forward.1} parent=1 // pred_fallthru
      _
    // Predicated region
    $region10: #{encoder_forward.1} parent=1 // pred_check
      _
    $region11: #{encoder_forward.1} parent=1 // pred_check_branch
      %33 = sbr.rel (0) target = $region13
    $region12: #{encoder_forward.1} parent=1 // pred_region
      %s35 = ssub.s32 64, 64
      %36 = vsyncadd [#allocation7], %s35
      %s38 = sshll.u32 [#allocation6], 4
      %s39 = int_to_ptr.vmem [resolvable:$true] %s38
      %41 = dma.hbm_to_vmem [thread:$0]  %s3, 64, %s39, [#allocation7]
    $region13: #{encoder_forward.1} parent=1 // pred_fallthru
      _
    // Predicated region
    $region14: #{encoder_forward.1} parent=1 // pred_check
      _
    $region15: #{encoder_forward.1} parent=1 // pred_check_branch
      %43 = sbr.rel (0) target = $region17
    $region16: #{encoder_forward.1} parent=1 // pred_region
      _
    $region17: #{encoder_forward.1} parent=1 // pred_fallthru
      _
    // Predicated region
    $region18: #{encoder_forward.1} parent=1 // pred_check
      _
    $region19: #{encoder_forward.1} parent=1 // pred_check_branch
      %45 = sbr.rel (0) target = $region21
    $region20: #{encoder_forward.1} parent=1 // pred_region
      %46 = dma.done [#allocation5], 16384
    $region21: #{encoder_forward.1} parent=1 // pred_fallthru
      _
    // Predicated region
    $region22: #{encoder_forward.1} parent=1 // pred_check
      _
    $region23: #{encoder_forward.1} parent=1 // pred_check_branch
      %48 = sbr.rel (0) target = $region25
    $region24: #{encoder_forward.1} parent=1 // pred_region
      %49 = dma.done [#allocation7], 64
    $region25: #{encoder_forward.1} parent=1 // pred_fallthru
      _
    %s50 = sld [smem:[#allocation3]]
    %p51 = scmp.lt.s32.totalorder %s50, 15
    %s52 = scalar_select %p51, %s50, 15
    %s53 = scalar_lea.vmem %s1, %s52
    %s54 = sld [smem:[#allocation3]]
    %p55 = scmp.lt.s32.totalorder %s54, 15
    %s56 = scalar_select %p55, %s54, 15
    %s57 = scalar_lea.vmem %s1, %s56
    %s58 = sld [smem:[#allocation3]]
    %v59 = vld [vmem:[#allocation4] sm:$0xff]
    %v60 = vld [vmem:[#allocation4 + $0x8] sm:$0xff]
    %v61 = vld [vmem:[#allocation4 + $0x10] sm:$0xff]
    %v62 = vld [vmem:[#allocation4 + $0x18] sm:$0xff]
    %v63 = vld [vmem:[#allocation4 + $0x20] sm:$0xff]
    %v64 = vld [vmem:[#allocation4 + $0x28] sm:$0xff]
    %v65 = vld [vmem:[#allocation4 + $0x30] sm:$0xff]
    %v66 = vld [vmem:[#allocation4 + $0x38] sm:$0xff]
    %v67 = vld [vmem:[#allocation4 + $0x40] sm:$0xff]
    %v68 = vld [vmem:[#allocation4 + $0x48] sm:$0xff]
    %v69 = vld [vmem:[#allocation4 + $0x50] sm:$0xff]
    %v70 = vld [vmem:[#allocation4 + $0x58] sm:$0xff]
    %v71 = vld [vmem:[#allocation4 + $0x60] sm:$0xff]
    %v72 = vld [vmem:[#allocation4 + $0x68] sm:$0xff]
    %v73 = vld [vmem:[#allocation4 + $0x70] sm:$0xff]
    %v74 = vld [vmem:[#allocation4 + $0x78] sm:$0xff]
    %v75 = vld [vmem:[#allocation4 + $0x80] sm:$0xff]
    %v76 = vld [vmem:[#allocation4 + $0x88] sm:$0xff]
    %v77 = vld [vmem:[#allocation4 + $0x90] sm:$0xff]
    %v78 = vld [vmem:[#allocation4 + $0x98] sm:$0xff]
    %v79 = vld [vmem:[#allocation4 + $0xa0] sm:$0xff]
    %v80 = vld [vmem:[#allocation4 + $0xa8] sm:$0xff]
    %v81 = vld [vmem:[#allocation4 + $0xb0] sm:$0xff]
    %v82 = vld [vmem:[#allocation4 + $0xb8] sm:$0xff]
    %v83 = vld [vmem:[#allocation4 + $0xc0] sm:$0xff]
    %v84 = vld [vmem:[#allocation4 + $0xc8] sm:$0xff]
    %v85 = vld [vmem:[#allocation4 + $0xd0] sm:$0xff]
    %v86 = vld [vmem:[#allocation4 + $0xd8] sm:$0xff]
    %v87 = vld [vmem:[#allocation4 + $0xe0] sm:$0xff]
    %v88 = vld [vmem:[#allocation4 + $0xe8] sm:$0xff]
    %v89 = vld [vmem:[#allocation4 + $0xf0] sm:$0xff]
    %v90 = vld [vmem:[#allocation4 + $0xf8] sm:$0xff]
    %v91 = vld [vmem:[#allocation4 + $0x100] sm:$0xff]
    %v92 = vld [vmem:[#allocation4 + $0x108] sm:$0xff]
    %v93 = vld [vmem:[#allocation4 + $0x110] sm:$0xff]
    %v94 = vld [vmem:[#allocation4 + $0x118] sm:$0xff]
    %v95 = vld [vmem:[#allocation4 + $0x120] sm:$0xff]
    %v96 = vld [vmem:[#allocation4 + $0x128] sm:$0xff]
    %v97 = vld [vmem:[#allocation4 + $0x130] sm:$0xff]
    %v98 = vld [vmem:[#allocation4 + $0x138] sm:$0xff]
    %v99 = vld [vmem:[#allocation4 + $0x140] sm:$0xff]
    %v100 = vld [vmem:[#allocation4 + $0x148] sm:$0xff]
    %v101 = vld [vmem:[#allocation4 + $0x150] sm:$0xff]
    %v102 = vld [vmem:[#allocation4 + $0x158] sm:$0xff]
    %v103 = vld [vmem:[#allocation4 + $0x160] sm:$0xff]
    %v104 = vld [vmem:[#allocation4 + $0x168] sm:$0xff]
    %v105 = vld [vmem:[#allocation4 + $0x170] sm:$0xff]
    %v106 = vld [vmem:[#allocation4 + $0x178] sm:$0xff]
    %v107 = vld [vmem:[#allocation4 + $0x180] sm:$0xff]
    %v108 = vld [vmem:[#allocation4 + $0x188] sm:$0xff]
    %v109 = vld [vmem:[#allocation4 + $0x190] sm:$0xff]
    %v110 = vld [vmem:[#allocation4 + $0x198] sm:$0xff]
    %v111 = vld [vmem:[#allocation4 + $0x1a0] sm:$0xff]
    %v112 = vld [vmem:[#allocation4 + $0x1a8] sm:$0xff]
    %v113 = vld [vmem:[#allocation4 + $0x1b0] sm:$0xff]
    %v114 = vld [vmem:[#allocation4 + $0x1b8] sm:$0xff]
    %v115 = vld [vmem:[#allocation4 + $0x1c0] sm:$0xff]
    %v116 = vld [vmem:[#allocation4 + $0x1c8] sm:$0xff]
    %v117 = vld [vmem:[#allocation4 + $0x1d0] sm:$0xff]
    %v118 = vld [vmem:[#allocation4 + $0x1d8] sm:$0xff]
    %v119 = vld [vmem:[#allocation4 + $0x1e0] sm:$0xff]
    %v120 = vld [vmem:[#allocation4 + $0x1e8] sm:$0xff]
    %v121 = vld [vmem:[#allocation4 + $0x1f0] sm:$0xff]
    %v122 = vld [vmem:[#allocation4 + $0x1f8] sm:$0xff]
    %v123 = vld [vmem:[#allocation4 + $0x200] sm:$0xff]
    %v124 = vld [vmem:[#allocation4 + $0x208] sm:$0xff]
    %v125 = vld [vmem:[#allocation4 + $0x210] sm:$0xff]
    %v126 = vld [vmem:[#allocation4 + $0x218] sm:$0xff]
    %v127 = vld [vmem:[#allocation4 + $0x220] sm:$0xff]
    %v128 = vld [vmem:[#allocation4 + $0x228] sm:$0xff]
    %v129 = vld [vmem:[#allocation4 + $0x230] sm:$0xff]
    %v130 = vld [vmem:[#allocation4 + $0x238] sm:$0xff]
    %v131 = vld [vmem:[#allocation4 + $0x240] sm:$0xff]
    %v132 = vld [vmem:[#allocation4 + $0x248] sm:$0xff]
    %v133 = vld [vmem:[#allocation4 + $0x250] sm:$0xff]
    %v134 = vld [vmem:[#allocation4 + $0x258] sm:$0xff]
    %v135 = vld [vmem:[#allocation4 + $0x260] sm:$0xff]
    %v136 = vld [vmem:[#allocation4 + $0x268] sm:$0xff]
    %v137 = vld [vmem:[#allocation4 + $0x270] sm:$0xff]
    %v138 = vld [vmem:[#allocation4 + $0x278] sm:$0xff]
    %v139 = vld [vmem:[#allocation4 + $0x280] sm:$0xff]
    %v140 = vld [vmem:[#allocation4 + $0x288] sm:$0xff]
    %v141 = vld [vmem:[#allocation4 + $0x290] sm:$0xff]
    %v142 = vld [vmem:[#allocation4 + $0x298] sm:$0xff]
    %v143 = vld [vmem:[#allocation4 + $0x2a0] sm:$0xff]
    %v144 = vld [vmem:[#allocation4 + $0x2a8] sm:$0xff]
    %v145 = vld [vmem:[#allocation4 + $0x2b0] sm:$0xff]
    %v146 = vld [vmem:[#allocation4 + $0x2b8] sm:$0xff]
    %v147 = vld [vmem:[#allocation4 + $0x2c0] sm:$0xff]
    %v148 = vld [vmem:[#allocation4 + $0x2c8] sm:$0xff]
    %v149 = vld [vmem:[#allocation4 + $0x2d0] sm:$0xff]
    %v150 = vld [vmem:[#allocation4 + $0x2d8] sm:$0xff]
    %v151 = vld [vmem:[#allocation4 + $0x2e0] sm:$0xff]
    %v152 = vld [vmem:[#allocation4 + $0x2e8] sm:$0xff]
    %v153 = vld [vmem:[#allocation4 + $0x2f0] sm:$0xff]
    %v154 = vld [vmem:[#allocation4 + $0x2f8] sm:$0xff]
    %v155 = vld [vmem:[#allocation4 + $0x300] sm:$0xff]
    %v156 = vld [vmem:[#allocation4 + $0x308] sm:$0xff]
    %v157 = vld [vmem:[#allocation4 + $0x310] sm:$0xff]
    %v158 = vld [vmem:[#allocation4 + $0x318] sm:$0xff]
    %v159 = vld [vmem:[#allocation4 + $0x320] sm:$0xff]
    %v160 = vld [vmem:[#allocation4 + $0x328] sm:$0xff]
    %v161 = vld [vmem:[#allocation4 + $0x330] sm:$0xff]
    %v162 = vld [vmem:[#allocation4 + $0x338] sm:$0xff]
    %v163 = vld [vmem:[#allocation4 + $0x340] sm:$0xff]
    %v164 = vld [vmem:[#allocation4 + $0x348] sm:$0xff]
    %v165 = vld [vmem:[#allocation4 + $0x350] sm:$0xff]
    %v166 = vld [vmem:[#allocation4 + $0x358] sm:$0xff]
    %v167 = vld [vmem:[#allocation4 + $0x360] sm:$0xff]
    %v168 = vld [vmem:[#allocation4 + $0x368] sm:$0xff]
    %v169 = vld [vmem:[#allocation4 + $0x370] sm:$0xff]
    %v170 = vld [vmem:[#allocation4 + $0x378] sm:$0xff]
    %v171 = vld [vmem:[#allocation4 + $0x380] sm:$0xff]
    %v172 = vld [vmem:[#allocation4 + $0x388] sm:$0xff]
    %v173 = vld [vmem:[#allocation4 + $0x390] sm:$0xff]
    %v174 = vld [vmem:[#allocation4 + $0x398] sm:$0xff]
    %v175 = vld [vmem:[#allocation4 + $0x3a0] sm:$0xff]
    %v176 = vld [vmem:[#allocation4 + $0x3a8] sm:$0xff]
    %v177 = vld [vmem:[#allocation4 + $0x3b0] sm:$0xff]
    %v178 = vld [vmem:[#allocation4 + $0x3b8] sm:$0xff]
    %v179 = vld [vmem:[#allocation4 + $0x3c0] sm:$0xff]
    %v180 = vld [vmem:[#allocation4 + $0x3c8] sm:$0xff]
    %v181 = vld [vmem:[#allocation4 + $0x3d0] sm:$0xff]
    %v182 = vld [vmem:[#allocation4 + $0x3d8] sm:$0xff]
    %v183 = vld [vmem:[#allocation4 + $0x3e0] sm:$0xff]
    %v184 = vld [vmem:[#allocation4 + $0x3e8] sm:$0xff]
    %v185 = vld [vmem:[#allocation4 + $0x3f0] sm:$0xff]
    %v186 = vld [vmem:[#allocation4 + $0x3f8] sm:$0xff]
    %v187 = vld [vmem:[#allocation6] sm:$0xf]
    %v188 = vld [vmem:[%s57] sm:$0x1]
    %v189 = vld [vmem:[%s4] sm:$0x1]
    %v191 = vlaneseq
    %v192 = vshrl.u32 %v191, 7
    %v193 = vsub.s32 0, %v192
    %v194 = vrot.slane %v187, %v193
    %v195 = vlaneseq
    %v196 = vshrl.u32 %v195, 7
    %v197 = vsub.s32 1, %v196
    %v198 = vrot.slane %v187, %v197
    %v199 = vlaneseq
    %v200 = vshrl.u32 %v199, 7
    %v201 = vsub.s32 2, %v200
    %v202 = vrot.slane %v187, %v201
    %v203 = vlaneseq
    %v204 = vshrl.u32 %v203, 7
    %v205 = vsub.s32 3, %v204
    %v206 = vrot.slane %v187, %v205
    %211 = vmatprep.subr.mxu0 %v60
    %212 = vmatpush1.msra.mxu0 %v59
    %213 = vmatprep.subr.mxu0 %v64
    %214 = vmatpush1.msra.mxu0 %v63
    %215 = vmatprep.subr.mxu0 %v68
    %216 = vmatpush1.msra.mxu0 %v67
    %217 = vmatprep.subr.mxu0 %v72
    %218 = vmatpush1.msra.mxu0 %v71
    %219 = vmatprep.subr.mxu0 %v76
    %220 = vmatpush1.msra.mxu0 %v75
    %221 = vmatprep.subr.mxu0 %v80
    %222 = vmatpush1.msra.mxu0 %v79
    %223 = vmatprep.subr.mxu0 %v84
    %224 = vmatpush1.msra.mxu0 %v83
    %225 = vmatprep.subr.mxu0 %v88
    %226 = vmatpush1.msra.mxu0 %v87
    %227 = vmatprep.subr.mxu0 %v92
    %228 = vmatpush1.msra.mxu0 %v91
    %229 = vmatprep.subr.mxu0 %v96
    %230 = vmatpush1.msra.mxu0 %v95
    %231 = vmatprep.subr.mxu0 %v100
    %232 = vmatpush1.msra.mxu0 %v99
    %233 = vmatprep.subr.mxu0 %v104
    %234 = vmatpush1.msra.mxu0 %v103
    %235 = vmatprep.subr.mxu0 %v108
    %236 = vmatpush1.msra.mxu0 %v107
    %237 = vmatprep.subr.mxu0 %v112
    %238 = vmatpush1.msra.mxu0 %v111
    %239 = vmatprep.subr.mxu0 %v116
    %240 = vmatpush1.msra.mxu0 %v115
    %241 = vmatprep.subr.mxu0 %v120
    %242 = vmatpush1.msra.mxu0 %v119
    %243 = vmatprep.subr.mxu0 %v124
    %244 = vmatpush1.msra.mxu0 %v123
    %245 = vmatprep.subr.mxu0 %v128
    %246 = vmatpush1.msra.mxu0 %v127
    %247 = vmatprep.subr.mxu0 %v132
    %248 = vmatpush1.msra.mxu0 %v131
    %249 = vmatprep.subr.mxu0 %v136
    %250 = vmatpush1.msra.mxu0 %v135
    %251 = vmatprep.subr.mxu0 %v140
    %252 = vmatpush1.msra.mxu0 %v139
    %253 = vmatprep.subr.mxu0 %v144
    %254 = vmatpush1.msra.mxu0 %v143
    %255 = vmatprep.subr.mxu0 %v148
    %256 = vmatpush1.msra.mxu0 %v147
    %257 = vmatprep.subr.mxu0 %v152
    %258 = vmatpush1.msra.mxu0 %v151
    %259 = vmatprep.subr.mxu0 %v156
    %260 = vmatpush1.msra.mxu0 %v155
    %261 = vmatprep.subr.mxu0 %v160
    %262 = vmatpush1.msra.mxu0 %v159
    %263 = vmatprep.subr.mxu0 %v164
    %264 = vmatpush1.msra.mxu0 %v163
    %265 = vmatprep.subr.mxu0 %v168
    %266 = vmatpush1.msra.mxu0 %v167
    %267 = vmatprep.subr.mxu0 %v172
    %268 = vmatpush1.msra.mxu0 %v171
    %269 = vmatprep.subr.mxu0 %v176
    %270 = vmatpush1.msra.mxu0 %v175
    %271 = vmatprep.subr.mxu0 %v180
    %272 = vmatpush1.msra.mxu0 %v179
    %273 = vmatprep.subr.mxu0 %v184
    %274 = vmatpush1.msra.mxu0 %v183
    %275 = vmatprep.mubr.f32.mxu0 %v189
    %276 = vmatmul.mubr.f32.gmra.mrb[0].mxu0 %v188
    %v277 = vpop.f32.mrb[0].mxu0
    %v278 = vadd.f32 %v194, %v277
    %v279 = vpop.f32.mrb[0].mxu0
    %v280 = vadd.f32 %v198, %v279
    %281 = vdwg.mxu0
    %282 = vmatprep.subr.mxu0 %v62
    %283 = vmatpush1.msra.mxu0 %v61
    %284 = vmatprep.subr.mxu0 %v66
    %285 = vmatpush1.msra.mxu0 %v65
    %286 = vmatprep.subr.mxu0 %v70
    %287 = vmatpush1.msra.mxu0 %v69
    %288 = vmatprep.subr.mxu0 %v74
    %289 = vmatpush1.msra.mxu0 %v73
    %290 = vmatprep.subr.mxu0 %v78
    %291 = vmatpush1.msra.mxu0 %v77
    %292 = vmatprep.subr.mxu0 %v82
    %293 = vmatpush1.msra.mxu0 %v81
    %294 = vmatprep.subr.mxu0 %v86
    %295 = vmatpush1.msra.mxu0 %v85
    %296 = vmatprep.subr.mxu0 %v90
    %297 = vmatpush1.msra.mxu0 %v89
    %298 = vmatprep.subr.mxu0 %v94
    %299 = vmatpush1.msra.mxu0 %v93
    %300 = vmatprep.subr.mxu0 %v98
    %301 = vmatpush1.msra.mxu0 %v97
    %302 = vmatprep.subr.mxu0 %v102
    %303 = vmatpush1.msra.mxu0 %v101
    %304 = vmatprep.subr.mxu0 %v106
    %305 = vmatpush1.msra.mxu0 %v105
    %306 = vmatprep.subr.mxu0 %v110
    %307 = vmatpush1.msra.mxu0 %v109
    %308 = vmatprep.subr.mxu0 %v114
    %309 = vmatpush1.msra.mxu0 %v113
    %310 = vmatprep.subr.mxu0 %v118
    %311 = vmatpush1.msra.mxu0 %v117
    %312 = vmatprep.subr.mxu0 %v122
    %313 = vmatpush1.msra.mxu0 %v121
    %314 = vmatprep.subr.mxu0 %v126
    %315 = vmatpush1.msra.mxu0 %v125
    %316 = vmatprep.subr.mxu0 %v130
    %317 = vmatpush1.msra.mxu0 %v129
    %318 = vmatprep.subr.mxu0 %v134
    %319 = vmatpush1.msra.mxu0 %v133
    %320 = vmatprep.subr.mxu0 %v138
    %321 = vmatpush1.msra.mxu0 %v137
    %322 = vmatprep.subr.mxu0 %v142
    %323 = vmatpush1.msra.mxu0 %v141
    %324 = vmatprep.subr.mxu0 %v146
    %325 = vmatpush1.msra.mxu0 %v145
    %326 = vmatprep.subr.mxu0 %v150
    %327 = vmatpush1.msra.mxu0 %v149
    %328 = vmatprep.subr.mxu0 %v154
    %329 = vmatpush1.msra.mxu0 %v153
    %330 = vmatprep.subr.mxu0 %v158
    %331 = vmatpush1.msra.mxu0 %v157
    %332 = vmatprep.subr.mxu0 %v162
    %333 = vmatpush1.msra.mxu0 %v161
    %334 = vmatprep.subr.mxu0 %v166
    %335 = vmatpush1.msra.mxu0 %v165
    %336 = vmatprep.subr.mxu0 %v170
    %337 = vmatpush1.msra.mxu0 %v169
    %338 = vmatprep.subr.mxu0 %v174
    %339 = vmatpush1.msra.mxu0 %v173
    %340 = vmatprep.subr.mxu0 %v178
    %341 = vmatpush1.msra.mxu0 %v177
    %342 = vmatprep.subr.mxu0 %v182
    %343 = vmatpush1.msra.mxu0 %v181
    %344 = vmatprep.subr.mxu0 %v186
    %345 = vmatpush1.msra.mxu0 %v185
    %346 = vmatprep.mubr.f32.mxu0 %v189
    %347 = vmatmul.mubr.f32.gmra.mrb[0].mxu0 %v188
    %v348 = vpop.f32.mrb[0].mxu0
    %v349 = vadd.f32 %v202, %v348
    %v350 = vpop.f32.mrb[0].mxu0
    %v351 = vadd.f32 %v206, %v350
    %352 = vdwg.mxu0
    %v353 = vxor.u32 %v278, 2147483648
    %v354 = vmul.f32 %v353, 1.442695
    %v355 = vpow.pop %v354
    %v356 = vadd.f32 %v355, 1.0
    %v357 = vrcp.pop %v356
    %v358 = vmul.f32 1.0, %v357
    %v359 = vxor.u32 %v280, 2147483648
    %v360 = vmul.f32 %v359, 1.442695
    %v361 = vpow.pop %v360
    %v362 = vadd.f32 %v361, 1.0
    %v363 = vrcp.pop %v362
    %v364 = vmul.f32 1.0, %v363
    %v365 = vmul.f32 %v358, %v351
    %v366 = vadd.f32 %v349, %v365
    %v367 = vtanh.pop %v366
    %v368 = vsub.f32 1.0, %v364
    %v369 = vmul.f32 %v368, %v367
    %v370 = vmul.f32 %v364, %v189
    %v371 = vadd.f32 %v369, %v370
    %372 = vmatprep.subr.mxu0 %v60
    %373 = vmatpush1.msra.mxu0 %v59
    %374 = vmatprep.subr.mxu0 %v64
    %375 = vmatpush1.msra.mxu0 %v63
    %376 = vmatprep.subr.mxu0 %v68
    %377 = vmatpush1.msra.mxu0 %v67
    %378 = vmatprep.subr.mxu0 %v72
    %379 = vmatpush1.msra.mxu0 %v71
    %380 = vmatprep.subr.mxu0 %v76
    %381 = vmatpush1.msra.mxu0 %v75
    %382 = vmatprep.subr.mxu0 %v80
    %383 = vmatpush1.msra.mxu0 %v79
    %384 = vmatprep.subr.mxu0 %v84
    %385 = vmatpush1.msra.mxu0 %v83
    %386 = vmatprep.subr.mxu0 %v88
    %387 = vmatpush1.msra.mxu0 %v87
    %388 = vmatprep.subr.mxu0 %v92
    %389 = vmatpush1.msra.mxu0 %v91
    %390 = vmatprep.subr.mxu0 %v96
    %391 = vmatpush1.msra.mxu0 %v95
    %392 = vmatprep.subr.mxu0 %v100
    %393 = vmatpush1.msra.mxu0 %v99
    %394 = vmatprep.subr.mxu0 %v104
    %395 = vmatpush1.msra.mxu0 %v103
    %396 = vmatprep.subr.mxu0 %v108
    %397 = vmatpush1.msra.mxu0 %v107
    %398 = vmatprep.subr.mxu0 %v112
    %399 = vmatpush1.msra.mxu0 %v111
    %400 = vmatprep.subr.mxu0 %v116
    %401 = vmatpush1.msra.mxu0 %v115
    %402 = vmatprep.subr.mxu0 %v120
    %403 = vmatpush1.msra.mxu0 %v119
    %404 = vmatprep.subr.mxu0 %v124
    %405 = vmatpush1.msra.mxu0 %v123
    %406 = vmatprep.subr.mxu0 %v128
    %407 = vmatpush1.msra.mxu0 %v127
    %408 = vmatprep.subr.mxu0 %v132
    %409 = vmatpush1.msra.mxu0 %v131
    %410 = vmatprep.subr.mxu0 %v136
    %411 = vmatpush1.msra.mxu0 %v135
    %412 = vmatprep.subr.mxu0 %v140
    %413 = vmatpush1.msra.mxu0 %v139
    %414 = vmatprep.subr.mxu0 %v144
    %415 = vmatpush1.msra.mxu0 %v143
    %416 = vmatprep.subr.mxu0 %v148
    %417 = vmatpush1.msra.mxu0 %v147
    %418 = vmatprep.subr.mxu0 %v152
    %419 = vmatpush1.msra.mxu0 %v151
    %420 = vmatprep.subr.mxu0 %v156
    %421 = vmatpush1.msra.mxu0 %v155
    %422 = vmatprep.subr.mxu0 %v160
    %423 = vmatpush1.msra.mxu0 %v159
    %424 = vmatprep.subr.mxu0 %v164
    %425 = vmatpush1.msra.mxu0 %v163
    %426 = vmatprep.subr.mxu0 %v168
    %427 = vmatpush1.msra.mxu0 %v167
    %428 = vmatprep.subr.mxu0 %v172
    %429 = vmatpush1.msra.mxu0 %v171
    %430 = vmatprep.subr.mxu0 %v176
    %431 = vmatpush1.msra.mxu0 %v175
    %432 = vmatprep.subr.mxu0 %v180
    %433 = vmatpush1.msra.mxu0 %v179
    %434 = vmatprep.subr.mxu0 %v184
    %435 = vmatpush1.msra.mxu0 %v183
    %436 = vmatprep.mubr.f32.mxu0 %v371
    %437 = vmatmul.mubr.f32.gmra.mrb[0].mxu0 %v371
    %v438 = vpop.f32.mrb[0].mxu0
    %v439 = vadd.f32 %v194, %v438
    %v440 = vpop.f32.mrb[0].mxu0
    %v441 = vadd.f32 %v198, %v440
    %442 = vdwg.mxu0
    %443 = vmatprep.subr.mxu0 %v62
    %444 = vmatpush1.msra.mxu0 %v61
    %445 = vmatprep.subr.mxu0 %v66
    %446 = vmatpush1.msra.mxu0 %v65
    %447 = vmatprep.subr.mxu0 %v70
    %448 = vmatpush1.msra.mxu0 %v69
    %449 = vmatprep.subr.mxu0 %v74
    %450 = vmatpush1.msra.mxu0 %v73
    %451 = vmatprep.subr.mxu0 %v78
    %452 = vmatpush1.msra.mxu0 %v77
    %453 = vmatprep.subr.mxu0 %v82
    %454 = vmatpush1.msra.mxu0 %v81
    %455 = vmatprep.subr.mxu0 %v86
    %456 = vmatpush1.msra.mxu0 %v85
    %457 = vmatprep.subr.mxu0 %v90
    %458 = vmatpush1.msra.mxu0 %v89
    %459 = vmatprep.subr.mxu0 %v94
    %460 = vmatpush1.msra.mxu0 %v93
    %461 = vmatprep.subr.mxu0 %v98
    %462 = vmatpush1.msra.mxu0 %v97
    %463 = vmatprep.subr.mxu0 %v102
    %464 = vmatpush1.msra.mxu0 %v101
    %465 = vmatprep.subr.mxu0 %v106
    %466 = vmatpush1.msra.mxu0 %v105
    %467 = vmatprep.subr.mxu0 %v110
    %468 = vmatpush1.msra.mxu0 %v109
    %469 = vmatprep.subr.mxu0 %v114
    %470 = vmatpush1.msra.mxu0 %v113
    %471 = vmatprep.subr.mxu0 %v118
    %472 = vmatpush1.msra.mxu0 %v117
    %473 = vmatprep.subr.mxu0 %v122
    %474 = vmatpush1.msra.mxu0 %v121
    %475 = vmatprep.subr.mxu0 %v126
    %476 = vmatpush1.msra.mxu0 %v125
    %477 = vmatprep.subr.mxu0 %v130
    %478 = vmatpush1.msra.mxu0 %v129
    %479 = vmatprep.subr.mxu0 %v134
    %480 = vmatpush1.msra.mxu0 %v133
    %481 = vmatprep.subr.mxu0 %v138
    %482 = vmatpush1.msra.mxu0 %v137
    %483 = vmatprep.subr.mxu0 %v142
    %484 = vmatpush1.msra.mxu0 %v141
    %485 = vmatprep.subr.mxu0 %v146
    %486 = vmatpush1.msra.mxu0 %v145
    %487 = vmatprep.subr.mxu0 %v150
    %488 = vmatpush1.msra.mxu0 %v149
    %489 = vmatprep.subr.mxu0 %v154
    %490 = vmatpush1.msra.mxu0 %v153
    %491 = vmatprep.subr.mxu0 %v158
    %492 = vmatpush1.msra.mxu0 %v157
    %493 = vmatprep.subr.mxu0 %v162
    %494 = vmatpush1.msra.mxu0 %v161
    %495 = vmatprep.subr.mxu0 %v166
    %496 = vmatpush1.msra.mxu0 %v165
    %497 = vmatprep.subr.mxu0 %v170
    %498 = vmatpush1.msra.mxu0 %v169
    %499 = vmatprep.subr.mxu0 %v174
    %500 = vmatpush1.msra.mxu0 %v173
    %501 = vmatprep.subr.mxu0 %v178
    %502 = vmatpush1.msra.mxu0 %v177
    %503 = vmatprep.subr.mxu0 %v182
    %504 = vmatpush1.msra.mxu0 %v181
    %505 = vmatprep.subr.mxu0 %v186
    %506 = vmatpush1.msra.mxu0 %v185
    %507 = vmatprep.mubr.f32.mxu0 %v371
    %508 = vmatmul.mubr.f32.gmra.mrb[0].mxu0 %v371
    %v509 = vpop.f32.mrb[0].mxu0
    %v510 = vadd.f32 %v202, %v509
    %v511 = vpop.f32.mrb[0].mxu0
    %v512 = vadd.f32 %v206, %v511
    %513 = vdwg.mxu0
    %v514 = vxor.u32 %v439, 2147483648
    %v515 = vmul.f32 %v514, 1.442695
    %v516 = vpow.pop %v515
    %v517 = vadd.f32 %v516, 1.0
    %v518 = vrcp.pop %v517
    %v519 = vmul.f32 1.0, %v518
    %v520 = vxor.u32 %v441, 2147483648
    %v521 = vmul.f32 %v520, 1.442695
    %v522 = vpow.pop %v521
    %v523 = vadd.f32 %v522, 1.0
    %v524 = vrcp.pop %v523
    %v525 = vmul.f32 1.0, %v524
    %v526 = vmul.f32 %v519, %v512
    %v527 = vadd.f32 %v510, %v526
    %v528 = vtanh.pop %v527
    %v529 = vsub.f32 1.0, %v525
    %v530 = vmul.f32 %v529, %v528
    %v531 = vmul.f32 %v525, %v371
    %v532 = vadd.f32 %v530, %v531
    %533 = vst [vmem:[%s5] sm:$0x1] %v532
    // Predicated region
    $region26: #{encoder_forward.1} parent=1 // pred_check
      _
    $region27: #{encoder_forward.1} parent=1 // pred_check_branch
      %535 = sbr.rel (0) target = $region29
    $region28: #{encoder_forward.1} parent=1 // pred_region
      _
    $region29: #{encoder_forward.1} parent=1 // pred_fallthru
      _
    // Predicated region
    $region30: #{encoder_forward.1} parent=1 // pred_check
      _
    $region31: #{encoder_forward.1} parent=1 // pred_check_branch
      %537 = sbr.rel (0) target = $region33
    $region32: #{encoder_forward.1} parent=1 // pred_region
      _
    $region33: #{encoder_forward.1} parent=1 // pred_fallthru
      _
    %538 = vsyncpa [#allocation5], 1
    %539 = vsyncpa [#allocation7], 1

</llo_original>
